<compile_context>
chip_gen: v6e
topology: v6e:2x2x1
jax: 0.10.0
libtpu: 0.0.40
codegen_flags: <defaults>
</compile_context>

<pallas_src>
import functools

import jax
import jax.numpy as jnp
from jax.experimental import pallas as pl
from jax.experimental.pallas import tpu as pltpu


def _round_up(n, m):
    return ((n + m - 1) // m) * m


def _pad2d(x, rows, cols):
    r, c = x.shape
    return jnp.pad(x, ((0, rows - r), (0, cols - c)))


def _dqn_kernel(x_ref, w1_ref, b1_ref, w2_ref, b2_ref, w3_ref, b3_ref, o_ref):
    # Matmul operands in the weight dtype (f32 or bf16); accumulate in f32 on the MXU.
    cdt = w1_ref.dtype
    x = x_ref[...].astype(cdt)

    # fc1 + ReLU (bias-add / ReLU stay in f32 — v5e VPU has no bf16 path)
    h1 = jnp.dot(x, w1_ref[...], preferred_element_type=jnp.float32)
    h1 = jnp.maximum(h1 + b1_ref[...], 0.0)

    # fc2 + ReLU
    h2 = jnp.dot(h1.astype(cdt), w2_ref[...], preferred_element_type=jnp.float32)
    h2 = jnp.maximum(h2 + b2_ref[...], 0.0)

    # fc3 (no activation), lane-dense store
    o = jnp.dot(h2.astype(cdt), w3_ref[...], preferred_element_type=jnp.float32)
    o_ref[...] = (o + b3_ref[...]).astype(o_ref.dtype)


def prepare_params(w1, b1, w2, b2, w3, b3, *, compute_dtype=jnp.float32):
    """Pad (and cast) parameters ONCE to TPU-friendly shapes; call at init, not per step.

    Weights are stored as (in_features, out_features) so the kernel computes y = x @ W + b.
    w1's input dim (D_in) is kept UNPADDED (the kernel takes x as (TB, D_in) directly).
    Biases are kept in f32 as (1, padded_out) rows.
    For v6e/v7x throughput, pass compute_dtype=jnp.bfloat16 (relax comparison tolerance).
    """
    D_in, H = w1.shape
    D_out = w3.shape[1]
    Hp = _round_up(H, 128)
    Op = _round_up(D_out, 128)

    w1p = _pad2d(w1, D_in, Hp).astype(compute_dtype)   # (D_in, Hp) — D_in unpadded
    w2p = _pad2d(w2, Hp, Hp).astype(compute_dtype)
    w3p = _pad2d(w3, Hp, Op).astype(compute_dtype)
    b1p = _pad2d(b1.reshape(1, -1), 1, Hp).astype(jnp.float32)
    b2p = _pad2d(b2.reshape(1, -1), 1, Hp).astype(jnp.float32)
    b3p = _pad2d(b3.reshape(1, -1), 1, Op).astype(jnp.float32)
    return (w1p, b1p, w2p, b2p, w3p, b3p)


@functools.partial(jax.jit, static_argnames=("out_dim", "block_batch"))
def dqn_forward(x, params, *, out_dim, block_batch=256):
    """Forward pass of DQNNetwork via one batch-gridded Pallas kernel.

    x:      (B, input_dim) float32
    params: tuple of pre-padded (w1p, b1p, w2p, b2p, w3p, b3p) from prepare_params()
    returns (B, out_dim) float32
    """
    w1p, b1p, w2p, b2p, w3p, b3p = params
    B, D_in = x.shape
    Hp = w1p.shape[1]
    Op = w3p.shape[1]

    # Batch tile selection:
    #  * small B: one block of round_up(B, 8) rows (minimal padding, grid 1).
    #  * large B: split into ceil(B / block_batch) blocks and size the tile to minimize
    #    zero-row padding; B=512, block_batch=256 -> grid 2 (both v7x TCs busy).
    if B <= block_batch:
        TB = _round_up(B, 8)
    else:
        n_blocks = pl.cdiv(B, block_batch)
        TB = _round_up(pl.cdiv(B, n_blocks), 8)
    Bp = _round_up(B, TB)

    # Only the batch dim is (maybe) padded per call; feature dim stays at real D_in.
    xp = x.astype(jnp.float32)
    if Bp != B:
        xp = jnp.pad(xp, ((0, Bp - B), (0, 0)))

    grid = (Bp // TB,)
    # Advisory cost estimate with REAL dims (fc1 contraction is D_in, not a padded 128).
    flops = 2 * Bp * (D_in * Hp + Hp * Hp + Hp * Op)
    bytes_accessed = (
        Bp * D_in * 4
        + sum(int(p.size) * p.dtype.itemsize for p in params)
        + Bp * Op * 4
    )

    out_padded = pl.pallas_call(
        _dqn_kernel,
        out_shape=jax.ShapeDtypeStruct((Bp, Op), jnp.float32),
        grid_spec=pltpu.PrefetchScalarGridSpec(
            num_scalar_prefetch=0,
            grid=grid,
            in_specs=[
                # x: streamed per batch block; last block dim == full array dim (D_in).
                pl.BlockSpec((TB, D_in), lambda i: (i, 0)),
                # weights/biases: constant block index -> stay resident in VMEM.
                # (If hidden_dim is scaled way up, add pipeline_mode=pl.Buffered(1) here
                #  and set vmem_limit_bytes; irrelevant at hidden=128.)
                pl.BlockSpec((D_in, Hp), lambda i: (0, 0)),
                pl.BlockSpec((1, Hp), lambda i: (0, 0)),
                pl.BlockSpec((Hp, Hp), lambda i: (0, 0)),
                pl.BlockSpec((1, Hp), lambda i: (0, 0)),
                pl.BlockSpec((Hp, Op), lambda i: (0, 0)),
                pl.BlockSpec((1, Op), lambda i: (0, 0)),
            ],
            out_specs=pl.BlockSpec((TB, Op), lambda i: (i, 0)),
        ),
        compiler_params=pltpu.CompilerParams(
            dimension_semantics=("parallel",),  # batch axis -> both TCs on v7x
        ),
        cost_estimate=pl.CostEstimate(
            flops=flops, transcendentals=0, bytes_accessed=bytes_accessed
        ),
    )(xp, w1p, b1p, w2p, b2p, w3p, b3p)

    return out_padded[:B, :out_dim]


def init_params(key, input_dim, output_dim, hidden_dim=128):
    """Deterministic init matching DQNNetwork.__init__:
    weights: xavier_uniform_; biases: PyTorch Linear default U(-1/sqrt(fan_in), 1/sqrt(fan_in)).
    Returned in (in_features, out_features) layout (i.e. PyTorch weight transposed)."""
    ks = jax.random.split(key, 6)

    def xavier(k, fan_in, fan_out):
        bound = (6.0 / (fan_in + fan_out)) ** 0.5
        return jax.random.uniform(k, (fan_in, fan_out), jnp.float32, -bound, bound)

    def bias(k, fan_in, fan_out):
        bound = 1.0 / (fan_in ** 0.5)
        return jax.random.uniform(k, (fan_out,), jnp.float32, -bound, bound)

    w1 = xavier(ks[0], input_dim, hidden_dim)
    b1 = bias(ks[1], input_dim, hidden_dim)
    w2 = xavier(ks[2], hidden_dim, hidden_dim)
    b2 = bias(ks[3], hidden_dim, hidden_dim)
    w3 = xavier(ks[4], hidden_dim, output_dim)
    b3 = bias(ks[5], hidden_dim, output_dim)
    return w1, b1, w2, b2, w3, b3


def _reference(x, raw_params):
    w1, b1, w2, b2, w3, b3 = raw_params
    h = jnp.maximum(x @ w1 + b1, 0.0)
    h = jnp.maximum(h @ w2 + b2, 0.0)
    return h @ w3 + b3


if __name__ == "__main__":
    # CartPole-like sizes: state dim 4, 2 actions, hidden 128.
    batch, input_dim, output_dim, hidden_dim = 8, 4, 2, 128

    key = jax.random.PRNGKey(0)
    kx, kp, kx2 = jax.random.split(key, 3)
    x = jax.random.normal(kx, (batch, input_dim), jnp.float32)

    raw_params = init_params(kp, input_dim, output_dim, hidden_dim)
    # Pad/cast once at init time (hoisted out of the per-call path).
    params_f32 = prepare_params(*raw_params, compute_dtype=jnp.float32)

    # Small batch (grid size 1, TB=8)
    out = dqn_forward(x, params_f32, out_dim=output_dim)
    out = jax.block_until_ready(out)
    ref = _reference(x, raw_params)
    assert out.shape == (batch, output_dim)
    assert jnp.allclose(out, ref, atol=1e-5, rtol=1e-5)

    # Larger batch exercising the pipelined batch grid (grid size 2, TB=256).
    big_batch = 512
    xb = jax.random.normal(kx2, (big_batch, input_dim), jnp.float32)
    out_b = dqn_forward(xb, params_f32, out_dim=output_dim)
    out_b = jax.block_until_ready(out_b)
    ref_b = _reference(xb, raw_params)
    assert out_b.shape == (big_batch, output_dim)
    assert jnp.allclose(out_b, ref_b, atol=1e-5, rtol=1e-5)

    # Odd batch size: TB picked to minimize zero-row padding (no 2x wasted work).
    xo = jax.random.normal(kx2, (130, input_dim), jnp.float32)
    out_o = jax.block_until_ready(dqn_forward(xo, params_f32, out_dim=output_dim))
    assert out_o.shape == (130, output_dim)
    assert jnp.allclose(out_o, _reference(xo, raw_params), atol=1e-5, rtol=1e-5)

    # bf16-weight path (v6e/v7x throughput opt-in): looser tolerance, fine for DQN.
    params_bf16 = prepare_params(*raw_params, compute_dtype=jnp.bfloat16)
    out_bf = jax.block_until_ready(dqn_forward(xb, params_bf16, out_dim=output_dim))
    assert out_bf.shape == (big_batch, output_dim)
    assert jnp.allclose(out_bf, ref_b, atol=5e-2, rtol=5e-2)

    print("KERNEL_OK")
</pallas_src>

<mosaic_0001>
module attributes {stable_mosaic.version = 11 : i64} {
  func.func @_dqn_kernel(%arg0: i32, %arg1: memref<8x4xf32, #tpu.memory_space<vmem>>, %arg2: memref<4x128xf32, #tpu.memory_space<vmem>>, %arg3: memref<1x128xf32, #tpu.memory_space<vmem>>, %arg4: memref<128x128xf32, #tpu.memory_space<vmem>>, %arg5: memref<1x128xf32, #tpu.memory_space<vmem>>, %arg6: memref<128x128xf32, #tpu.memory_space<vmem>>, %arg7: memref<1x128xf32, #tpu.memory_space<vmem>>, %arg8: memref<8x128xf32, #tpu.memory_space<vmem>>) attributes {dimension_semantics = [#tpu.dimension_semantics<parallel>], iteration_bounds = array<i64: 1>, scalar_prefetch = 0 : i64, scratch_operands = 0 : i64, tpu.core_type = #tpu.core_type<tc>, window_params = [{transform_indices = @transform_0, window_bounds = array<i64: 8, 4>}, {pipeline_mode = #tpu.pipeline_mode<synchronous>, transform_indices = @transform_1, window_bounds = array<i64: 4, 128>}, {pipeline_mode = #tpu.pipeline_mode<synchronous>, transform_indices = @transform_2, window_bounds = array<i64: 1, 128>}, {pipeline_mode = #tpu.pipeline_mode<synchronous>, transform_indices = @transform_3, window_bounds = array<i64: 128, 128>}, {pipeline_mode = #tpu.pipeline_mode<synchronous>, transform_indices = @transform_4, window_bounds = array<i64: 1, 128>}, {pipeline_mode = #tpu.pipeline_mode<synchronous>, transform_indices = @transform_5, window_bounds = array<i64: 128, 128>}, {pipeline_mode = #tpu.pipeline_mode<synchronous>, transform_indices = @transform_6, window_bounds = array<i64: 1, 128>}, {transform_indices = @transform_7, window_bounds = array<i64: 8, 128>}]} {
    %c0 = arith.constant 0 : index
    %c0_0 = arith.constant 0 : index
    %0 = vector.load %arg1[%c0, %c0_0] : memref<8x4xf32, #tpu.memory_space<vmem>>, vector<8x4xf32>
    %c0_1 = arith.constant 0 : index
    %c0_2 = arith.constant 0 : index
    %1 = vector.load %arg2[%c0_1, %c0_2] : memref<4x128xf32, #tpu.memory_space<vmem>>, vector<4x128xf32>
    %cst = arith.constant dense<0.000000e+00> : vector<8x128xf32>
    %2 = tpu.matmul %0, %1, %cst {dimension_numbers = #tpu.dot_dimension_numbers<[1], [0], [0], [1], [0, 0, 1, 1], [], []>} : vector<8x4xf32>, vector<4x128xf32>, vector<8x128xf32> -> vector<8x128xf32>
    %c0_3 = arith.constant 0 : index
    %c0_4 = arith.constant 0 : index
    %3 = vector.load %arg3[%c0_3, %c0_4] : memref<1x128xf32, #tpu.memory_space<vmem>>, vector<1x128xf32>
    %4 = vector.broadcast %3 : vector<1x128xf32> to vector<8x128xf32>
    %5 = arith.addf %2, %4 : vector<8x128xf32>
    %cst_5 = arith.constant 0.000000e+00 : f32
    %6 = vector.broadcast %cst_5 : f32 to vector<8x128xf32>
    %7 = arith.maximumf %5, %6 : vector<8x128xf32>
    %c0_6 = arith.constant 0 : index
    %c0_7 = arith.constant 0 : index
    %8 = vector.load %arg4[%c0_6, %c0_7] : memref<128x128xf32, #tpu.memory_space<vmem>>, vector<128x128xf32>
    %cst_8 = arith.constant dense<0.000000e+00> : vector<8x128xf32>
    %9 = tpu.matmul %7, %8, %cst_8 {dimension_numbers = #tpu.dot_dimension_numbers<[1], [0], [0], [1], [0, 0, 1, 1], [], []>} : vector<8x128xf32>, vector<128x128xf32>, vector<8x128xf32> -> vector<8x128xf32>
    %c0_9 = arith.constant 0 : index
    %c0_10 = arith.constant 0 : index
    %10 = vector.load %arg5[%c0_9, %c0_10] : memref<1x128xf32, #tpu.memory_space<vmem>>, vector<1x128xf32>
    %11 = vector.broadcast %10 : vector<1x128xf32> to vector<8x128xf32>
    %12 = arith.addf %9, %11 : vector<8x128xf32>
    %cst_11 = arith.constant 0.000000e+00 : f32
    %13 = vector.broadcast %cst_11 : f32 to vector<8x128xf32>
    %14 = arith.maximumf %12, %13 : vector<8x128xf32>
    %c0_12 = arith.constant 0 : index
    %c0_13 = arith.constant 0 : index
    %15 = vector.load %arg6[%c0_12, %c0_13] : memref<128x128xf32, #tpu.memory_space<vmem>>, vector<128x128xf32>
    %cst_14 = arith.constant dense<0.000000e+00> : vector<8x128xf32>
    %16 = tpu.matmul %14, %15, %cst_14 {dimension_numbers = #tpu.dot_dimension_numbers<[1], [0], [0], [1], [0, 0, 1, 1], [], []>} : vector<8x128xf32>, vector<128x128xf32>, vector<8x128xf32> -> vector<8x128xf32>
    %c0_15 = arith.constant 0 : index
    %c0_16 = arith.constant 0 : index
    %17 = vector.load %arg7[%c0_15, %c0_16] : memref<1x128xf32, #tpu.memory_space<vmem>>, vector<1x128xf32>
    %18 = vector.broadcast %17 : vector<1x128xf32> to vector<8x128xf32>
    %19 = arith.addf %16, %18 : vector<8x128xf32>
    %c0_17 = arith.constant 0 : index
    %c0_18 = arith.constant 0 : index
    %20 = vector.load %arg8[%c0_17, %c0_18] : memref<8x128xf32, #tpu.memory_space<vmem>>, vector<8x128xf32>
    tpu.vector_store %arg8[%c0_17, %c0_18], %19 {strides = array<i32>} : memref<8x128xf32, #tpu.memory_space<vmem>>, vector<8x128xf32>,
    return
  }
  func.func @transform_0(%arg0: i32) -> (i32, i32) {
    %c0_i32 = arith.constant 0 : i32
    %c0_i32_0 = arith.constant 0 : i32
    return %arg0, %c0_i32 : i32, i32
  }
  func.func @transform_1(%arg0: i32) -> (i32, i32) {
    %c0_i32 = arith.constant 0 : i32
    %c0_i32_0 = arith.constant 0 : i32
    %c0_i32_1 = arith.constant 0 : i32
    return %c0_i32, %c0_i32_0 : i32, i32
  }
  func.func @transform_2(%arg0: i32) -> (i32, i32) {
    %c0_i32 = arith.constant 0 : i32
    %c0_i32_0 = arith.constant 0 : i32
    %c0_i32_1 = arith.constant 0 : i32
    return %c0_i32, %c0_i32_0 : i32, i32
  }
  func.func @transform_3(%arg0: i32) -> (i32, i32) {
    %c0_i32 = arith.constant 0 : i32
    %c0_i32_0 = arith.constant 0 : i32
    %c0_i32_1 = arith.constant 0 : i32
    return %c0_i32, %c0_i32_0 : i32, i32
  }
  func.func @transform_4(%arg0: i32) -> (i32, i32) {
    %c0_i32 = arith.constant 0 : i32
    %c0_i32_0 = arith.constant 0 : i32
    %c0_i32_1 = arith.constant 0 : i32
    return %c0_i32, %c0_i32_0 : i32, i32
  }
  func.func @transform_5(%arg0: i32) -> (i32, i32) {
    %c0_i32 = arith.constant 0 : i32
    %c0_i32_0 = arith.constant 0 : i32
    %c0_i32_1 = arith.constant 0 : i32
    return %c0_i32, %c0_i32_0 : i32, i32
  }
  func.func @transform_6(%arg0: i32) -> (i32, i32) {
    %c0_i32 = arith.constant 0 : i32
    %c0_i32_0 = arith.constant 0 : i32
    %c0_i32_1 = arith.constant 0 : i32
    return %c0_i32, %c0_i32_0 : i32, i32
  }
  func.func @transform_7(%arg0: i32) -> (i32, i32) {
    %c0_i32 = arith.constant 0 : i32
    %c0_i32_0 = arith.constant 0 : i32
    return %arg0, %c0_i32 : i32, i32
  }
}

</mosaic_0001>

<llo_original>
// kernel: dqn_forward.1
$region0: #{dqn_forward.1}
  #allocation0 [shape = 'u32[]', space=smem, size = 0x4, offset = 0x4, fixed_abs, tag = 'smem constant byte address 0x4 - core index']
  #allocation1 [shape = 'u32[144,128]{1,0:T(1,128)}', space=vmem, size = 0x12000, scoped, tag = 'internal scratch']
  %s0 = inlined_call_operand.vmem [shape: f32[8,4], index: 0, kind: input, shape index: {}]
  %s1 = inlined_call_operand.vmem [shape: f32[4,128], index: 1, kind: input, shape index: {}]
  %s2 = inlined_call_operand.vmem [shape: f32[1,128], index: 2, kind: input, shape index: {}]
  %s3 = inlined_call_operand.hbm [shape: f32[128,128], index: 3, kind: input, shape index: {}]
  %s4 = inlined_call_operand.vmem [shape: f32[1,128], index: 4, kind: input, shape index: {}]
  %s5 = inlined_call_operand.hbm [shape: f32[128,128], index: 5, kind: input, shape index: {}]
  %s6 = inlined_call_operand.vmem [shape: f32[1,128], index: 6, kind: input, shape index: {}]
  %s7 = inlined_call_operand.vmem [shape: f32[8,128], index: 7, kind: output, shape index: {}]
  %s8 = sld [smem:[#allocation0]]
  $region46: #{dqn_forward.1} parent=0
    _
  %s10 = ssub.s32 1, %s8
  %s11 = scalar_select 0, %s10, %s8
  $region1: #{dqn_forward.1} parent=0
    #allocation2 [shape = 'u8[65536]{0}', space=vmem, size = 0x10000, scoped, tag = 'input window, operand 3, single buffered']
    #allocation3 [shape = 's32[1]{0}', space=sflag, size = 0x4, scoped, tag = 'scoped memory for dqn_forward.1']
    #allocation4 [shape = 'u8[65536]{0}', space=vmem, size = 0x10000, scoped, tag = 'input window, operand 5, single buffered']
    #allocation5 [shape = 's32[1]{0}', space=sflag, size = 0x4, scoped, tag = 'scoped memory for dqn_forward.1']
    %12 = vsyncpa [#allocation3], 0
    %13 = vsyncpa [#allocation5], 0
    // Predicated region
    $region2: #{dqn_forward.1} parent=1 // pred_check
      _
    $region3: #{dqn_forward.1} parent=1 // pred_check_branch
      %15 = sbr.rel (0) target = $region5
    $region4: #{dqn_forward.1} parent=1 // pred_region
      _
    $region5: #{dqn_forward.1} parent=1 // pred_fallthru
      _
    // Predicated region
    $region6: #{dqn_forward.1} parent=1 // pred_check
      _
    $region7: #{dqn_forward.1} parent=1 // pred_check_branch
      %17 = sbr.rel (0) target = $region9
    $region8: #{dqn_forward.1} parent=1 // pred_region
      _
    $region9: #{dqn_forward.1} parent=1 // pred_fallthru
      _
    // Predicated region
    $region10: #{dqn_forward.1} parent=1 // pred_check
      _
    $region11: #{dqn_forward.1} parent=1 // pred_check_branch
      %19 = sbr.rel (0) target = $region13
    $region12: #{dqn_forward.1} parent=1 // pred_region
      _
    $region13: #{dqn_forward.1} parent=1 // pred_fallthru
      _
    // Predicated region
    $region14: #{dqn_forward.1} parent=1 // pred_check
      _
    $region15: #{dqn_forward.1} parent=1 // pred_check_branch
      %21 = sbr.rel (0) target = $region17
    $region16: #{dqn_forward.1} parent=1 // pred_region
      %s23 = ssub.s32 2048, 2048
      %24 = vsyncadd [#allocation3], %s23
      %s25 = sshll.u32 [#allocation2], 4
      %s26 = int_to_ptr.vmem [resolvable:$true] %s25
      %31 = dma.hbm_to_vmem [thread:$0]  %s3, 2048, %s26, [#allocation3], 128, 128, 8
    $region17: #{dqn_forward.1} parent=1 // pred_fallthru
      _
    // Predicated region
    $region18: #{dqn_forward.1} parent=1 // pred_check
      _
    $region19: #{dqn_forward.1} parent=1 // pred_check_branch
      %33 = sbr.rel (0) target = $region21
    $region20: #{dqn_forward.1} parent=1 // pred_region
      _
    $region21: #{dqn_forward.1} parent=1 // pred_fallthru
      _
    // Predicated region
    $region22: #{dqn_forward.1} parent=1 // pred_check
      _
    $region23: #{dqn_forward.1} parent=1 // pred_check_branch
      %35 = sbr.rel (0) target = $region25
    $region24: #{dqn_forward.1} parent=1 // pred_region
      %s37 = ssub.s32 2048, 2048
      %38 = vsyncadd [#allocation5], %s37
      %s39 = sshll.u32 [#allocation4], 4
      %s40 = int_to_ptr.vmem [resolvable:$true] %s39
      %45 = dma.hbm_to_vmem [thread:$0]  %s5, 2048, %s40, [#allocation5], 128, 128, 8
    $region25: #{dqn_forward.1} parent=1 // pred_fallthru
      _
    // Predicated region
    $region26: #{dqn_forward.1} parent=1 // pred_check
      _
    $region27: #{dqn_forward.1} parent=1 // pred_check_branch
      %47 = sbr.rel (0) target = $region29
    $region28: #{dqn_forward.1} parent=1 // pred_region
      _
    $region29: #{dqn_forward.1} parent=1 // pred_fallthru
      _
    // Predicated region
    $region30: #{dqn_forward.1} parent=1 // pred_check
      _
    $region31: #{dqn_forward.1} parent=1 // pred_check_branch
      %49 = sbr.rel (0) target = $region33
    $region32: #{dqn_forward.1} parent=1 // pred_region
      %50 = dma.done [#allocation3], 2048
    $region33: #{dqn_forward.1} parent=1 // pred_fallthru
      _
    // Predicated region
    $region34: #{dqn_forward.1} parent=1 // pred_check
      _
    $region35: #{dqn_forward.1} parent=1 // pred_check_branch
      %52 = sbr.rel (0) target = $region37
    $region36: #{dqn_forward.1} parent=1 // pred_region
      %53 = dma.done [#allocation5], 2048
    $region37: #{dqn_forward.1} parent=1 // pred_fallthru
      _
    %v54 = vld [vmem:[%s0] sm:$0xff]
    %v55 = vld [vmem:[%s1] sm:$0xf]
    %v56 = vld [vmem:[%s2] sm:$0x1]
    %v58 = vlaneseq
    %v59 = vshrl.u32 %v58, 7
    %v60 = vsub.s32 0, %v59
    %v61 = vrot.slane %v56, %v60
    %vm63 = vcmask 31744
    %v65 = vsel %vm63, %v54, 0
    %vm67 = vcmask 1043456
    %v69 = vsel %vm67, %v55, 0
    %71 = vmatprep.subr.mxu0 0.0
    %72 = vmatpush1.msra.mxu0 0.0
    %73 = vmatprep.subr.mxu0 0.0
    %74 = vmatpush1.msra.mxu0 0.0
    %75 = vmatprep.subr.mxu0 0.0
    %76 = vmatpush1.msra.mxu0 0.0
    %77 = vmatprep.subr.mxu0 0.0
    %78 = vmatpush1.msra.mxu0 0.0
    %79 = vmatprep.subr.mxu0 0.0
    %80 = vmatpush1.msra.mxu0 0.0
    %81 = vmatprep.subr.mxu0 0.0
    %82 = vmatpush1.msra.mxu0 0.0
    %83 = vmatprep.subr.mxu0 0.0
    %84 = vmatpush1.msra.mxu0 0.0
    %85 = vmatprep.subr.mxu0 0.0
    %86 = vmatpush1.msra.mxu0 0.0
    %87 = vmatprep.subr.mxu0 0.0
    %88 = vmatpush1.msra.mxu0 0.0
    %89 = vmatprep.subr.mxu0 0.0
    %90 = vmatpush1.msra.mxu0 0.0
    %91 = vmatprep.subr.mxu0 0.0
    %92 = vmatpush1.msra.mxu0 0.0
    %93 = vmatprep.subr.mxu0 0.0
    %94 = vmatpush1.msra.mxu0 0.0
    %95 = vmatprep.subr.mxu0 0.0
    %96 = vmatpush1.msra.mxu0 0.0
    %97 = vmatprep.subr.mxu0 0.0
    %98 = vmatpush1.msra.mxu0 0.0
    %99 = vmatprep.subr.mxu0 0.0
    %100 = vmatpush1.msra.mxu0 0.0
    %101 = vmatprep.subr.mxu0 0.0
    %102 = vmatpush1.msra.mxu0 %v69
    %103 = vmatprep.subr.mxu0 0.0
    %104 = vmatpush2.msra.mxu0 0.0
    %105 = vmatprep.subr.mxu0 0.0
    %106 = vmatpush2.msra.mxu0 0.0
    %107 = vmatprep.subr.mxu0 0.0
    %108 = vmatpush2.msra.mxu0 0.0
    %109 = vmatprep.subr.mxu0 0.0
    %110 = vmatpush2.msra.mxu0 0.0
    %111 = vmatprep.subr.mxu0 0.0
    %112 = vmatpush2.msra.mxu0 0.0
    %113 = vmatprep.subr.mxu0 0.0
    %114 = vmatpush2.msra.mxu0 0.0
    %115 = vmatprep.subr.mxu0 0.0
    %116 = vmatpush2.msra.mxu0 0.0
    %117 = vmatprep.subr.mxu0 0.0
    %118 = vmatpush2.msra.mxu0 0.0
    %119 = vmatprep.subr.mxu0 0.0
    %120 = vmatpush2.msra.mxu0 0.0
    %121 = vmatprep.subr.mxu0 0.0
    %122 = vmatpush2.msra.mxu0 0.0
    %123 = vmatprep.subr.mxu0 0.0
    %124 = vmatpush2.msra.mxu0 0.0
    %125 = vmatprep.subr.mxu0 0.0
    %126 = vmatpush2.msra.mxu0 0.0
    %127 = vmatprep.subr.mxu0 0.0
    %128 = vmatpush2.msra.mxu0 0.0
    %129 = vmatprep.subr.mxu0 0.0
    %130 = vmatpush2.msra.mxu0 0.0
    %131 = vmatprep.subr.mxu0 0.0
    %132 = vmatpush2.msra.mxu0 0.0
    %133 = vmatprep.subr.mxu0 0.0
    %134 = vmatpush2.msra.mxu0 0.0
    %135 = vmatprep.mubr.f32.mxu0 0.0
    %136 = vmatmul.mubr.f32.gmra.mxu0 %v65
    %v137 = vpop.f32.mrf.mxu0
    %v138 = vadd.f32 %v61, %v137
    %v139 = vpop.f32.mrf.mxu0
    %140 = vdwg.mxu0
    %v141 = vmax.f32 %v138, 0.0
    %v142 = vld [vmem:[#allocation2] sm:$0xff]
    %v143 = vld [vmem:[#allocation2 + $0x8] sm:$0xff]
    %v144 = vld [vmem:[#allocation2 + $0x10] sm:$0xff]
    %v145 = vld [vmem:[#allocation2 + $0x18] sm:$0xff]
    %v146 = vld [vmem:[#allocation2 + $0x20] sm:$0xff]
    %v147 = vld [vmem:[#allocation2 + $0x28] sm:$0xff]
    %v148 = vld [vmem:[#allocation2 + $0x30] sm:$0xff]
    %v149 = vld [vmem:[#allocation2 + $0x38] sm:$0xff]
    %v150 = vld [vmem:[#allocation2 + $0x40] sm:$0xff]
    %v151 = vld [vmem:[#allocation2 + $0x48] sm:$0xff]
    %v152 = vld [vmem:[#allocation2 + $0x50] sm:$0xff]
    %v153 = vld [vmem:[#allocation2 + $0x58] sm:$0xff]
    %v154 = vld [vmem:[#allocation2 + $0x60] sm:$0xff]
    %v155 = vld [vmem:[#allocation2 + $0x68] sm:$0xff]
    %v156 = vld [vmem:[#allocation2 + $0x70] sm:$0xff]
    %v157 = vld [vmem:[#allocation2 + $0x78] sm:$0xff]
    %v158 = vld [vmem:[%s4] sm:$0x1]
    %v160 = vlaneseq
    %v161 = vshrl.u32 %v160, 7
    %v162 = vsub.s32 0, %v161
    %v163 = vrot.slane %v158, %v162
    %165 = vmatprep.subr.mxu0 0.0
    %166 = vmatpush1.msra.mxu0 %v157
    %167 = vmatprep.subr.mxu0 0.0
    %168 = vmatpush1.msra.mxu0 %v156
    %169 = vmatprep.subr.mxu0 0.0
    %170 = vmatpush1.msra.mxu0 %v155
    %171 = vmatprep.subr.mxu0 0.0
    %172 = vmatpush1.msra.mxu0 %v154
    %173 = vmatprep.subr.mxu0 0.0
    %174 = vmatpush1.msra.mxu0 %v153
    %175 = vmatprep.subr.mxu0 0.0
    %176 = vmatpush1.msra.mxu0 %v152
    %177 = vmatprep.subr.mxu0 0.0
    %178 = vmatpush1.msra.mxu0 %v151
    %179 = vmatprep.subr.mxu0 0.0
    %180 = vmatpush1.msra.mxu0 %v150
    %181 = vmatprep.subr.mxu0 0.0
    %182 = vmatpush1.msra.mxu0 %v149
    %183 = vmatprep.subr.mxu0 0.0
    %184 = vmatpush1.msra.mxu0 %v148
    %185 = vmatprep.subr.mxu0 0.0
    %186 = vmatpush1.msra.mxu0 %v147
    %187 = vmatprep.subr.mxu0 0.0
    %188 = vmatpush1.msra.mxu0 %v146
    %189 = vmatprep.subr.mxu0 0.0
    %190 = vmatpush1.msra.mxu0 %v145
    %191 = vmatprep.subr.mxu0 0.0
    %192 = vmatpush1.msra.mxu0 %v144
    %193 = vmatprep.subr.mxu0 0.0
    %194 = vmatpush1.msra.mxu0 %v143
    %195 = vmatprep.subr.mxu0 0.0
    %196 = vmatpush1.msra.mxu0 %v142
    %197 = vmatprep.subr.mxu0 0.0
    %198 = vmatpush2.msra.mxu0 0.0
    %199 = vmatprep.subr.mxu0 0.0
    %200 = vmatpush2.msra.mxu0 0.0
    %201 = vmatprep.subr.mxu0 0.0
    %202 = vmatpush2.msra.mxu0 0.0
    %203 = vmatprep.subr.mxu0 0.0
    %204 = vmatpush2.msra.mxu0 0.0
    %205 = vmatprep.subr.mxu0 0.0
    %206 = vmatpush2.msra.mxu0 0.0
    %207 = vmatprep.subr.mxu0 0.0
    %208 = vmatpush2.msra.mxu0 0.0
    %209 = vmatprep.subr.mxu0 0.0
    %210 = vmatpush2.msra.mxu0 0.0
    %211 = vmatprep.subr.mxu0 0.0
    %212 = vmatpush2.msra.mxu0 0.0
    %213 = vmatprep.subr.mxu0 0.0
    %214 = vmatpush2.msra.mxu0 0.0
    %215 = vmatprep.subr.mxu0 0.0
    %216 = vmatpush2.msra.mxu0 0.0
    %217 = vmatprep.subr.mxu0 0.0
    %218 = vmatpush2.msra.mxu0 0.0
    %219 = vmatprep.subr.mxu0 0.0
    %220 = vmatpush2.msra.mxu0 0.0
    %221 = vmatprep.subr.mxu0 0.0
    %222 = vmatpush2.msra.mxu0 0.0
    %223 = vmatprep.subr.mxu0 0.0
    %224 = vmatpush2.msra.mxu0 0.0
    %225 = vmatprep.subr.mxu0 0.0
    %226 = vmatpush2.msra.mxu0 0.0
    %227 = vmatprep.subr.mxu0 0.0
    %228 = vmatpush2.msra.mxu0 0.0
    %229 = vmatprep.mubr.f32.mxu0 0.0
    %230 = vmatmul.mubr.f32.gmra.mxu0 %v141
    %v231 = vpop.f32.mrf.mxu0
    %v232 = vadd.f32 %v163, %v231
    %v233 = vpop.f32.mrf.mxu0
    %234 = vdwg.mxu0
    %v235 = vmax.f32 %v232, 0.0
    %v236 = vld [vmem:[#allocation4] sm:$0xff]
    %v237 = vld [vmem:[#allocation4 + $0x8] sm:$0xff]
    %v238 = vld [vmem:[#allocation4 + $0x10] sm:$0xff]
    %v239 = vld [vmem:[#allocation4 + $0x18] sm:$0xff]
    %v240 = vld [vmem:[#allocation4 + $0x20] sm:$0xff]
    %v241 = vld [vmem:[#allocation4 + $0x28] sm:$0xff]
    %v242 = vld [vmem:[#allocation4 + $0x30] sm:$0xff]
    %v243 = vld [vmem:[#allocation4 + $0x38] sm:$0xff]
    %v244 = vld [vmem:[#allocation4 + $0x40] sm:$0xff]
    %v245 = vld [vmem:[#allocation4 + $0x48] sm:$0xff]
    %v246 = vld [vmem:[#allocation4 + $0x50] sm:$0xff]
    %v247 = vld [vmem:[#allocation4 + $0x58] sm:$0xff]
    %v248 = vld [vmem:[#allocation4 + $0x60] sm:$0xff]
    %v249 = vld [vmem:[#allocation4 + $0x68] sm:$0xff]
    %v250 = vld [vmem:[#allocation4 + $0x70] sm:$0xff]
    %v251 = vld [vmem:[#allocation4 + $0x78] sm:$0xff]
    %v252 = vld [vmem:[%s6] sm:$0x1]
    %v254 = vlaneseq
    %v255 = vshrl.u32 %v254, 7
    %v256 = vsub.s32 0, %v255
    %v257 = vrot.slane %v252, %v256
    %259 = vmatprep.subr.mxu0 0.0
    %260 = vmatpush1.msra.mxu0 %v251
    %261 = vmatprep.subr.mxu0 0.0
    %262 = vmatpush1.msra.mxu0 %v250
    %263 = vmatprep.subr.mxu0 0.0
    %264 = vmatpush1.msra.mxu0 %v249
    %265 = vmatprep.subr.mxu0 0.0
    %266 = vmatpush1.msra.mxu0 %v248
    %267 = vmatprep.subr.mxu0 0.0
    %268 = vmatpush1.msra.mxu0 %v247
    %269 = vmatprep.subr.mxu0 0.0
    %270 = vmatpush1.msra.mxu0 %v246
    %271 = vmatprep.subr.mxu0 0.0
    %272 = vmatpush1.msra.mxu0 %v245
    %273 = vmatprep.subr.mxu0 0.0
    %274 = vmatpush1.msra.mxu0 %v244
    %275 = vmatprep.subr.mxu0 0.0
    %276 = vmatpush1.msra.mxu0 %v243
    %277 = vmatprep.subr.mxu0 0.0
    %278 = vmatpush1.msra.mxu0 %v242
    %279 = vmatprep.subr.mxu0 0.0
    %280 = vmatpush1.msra.mxu0 %v241
    %281 = vmatprep.subr.mxu0 0.0
    %282 = vmatpush1.msra.mxu0 %v240
    %283 = vmatprep.subr.mxu0 0.0
    %284 = vmatpush1.msra.mxu0 %v239
    %285 = vmatprep.subr.mxu0 0.0
    %286 = vmatpush1.msra.mxu0 %v238
    %287 = vmatprep.subr.mxu0 0.0
    %288 = vmatpush1.msra.mxu0 %v237
    %289 = vmatprep.subr.mxu0 0.0
    %290 = vmatpush1.msra.mxu0 %v236
    %291 = vmatprep.subr.mxu0 0.0
    %292 = vmatpush2.msra.mxu0 0.0
    %293 = vmatprep.subr.mxu0 0.0
    %294 = vmatpush2.msra.mxu0 0.0
    %295 = vmatprep.subr.mxu0 0.0
    %296 = vmatpush2.msra.mxu0 0.0
    %297 = vmatprep.subr.mxu0 0.0
    %298 = vmatpush2.msra.mxu0 0.0
    %299 = vmatprep.subr.mxu0 0.0
    %300 = vmatpush2.msra.mxu0 0.0
    %301 = vmatprep.subr.mxu0 0.0
    %302 = vmatpush2.msra.mxu0 0.0
    %303 = vmatprep.subr.mxu0 0.0
    %304 = vmatpush2.msra.mxu0 0.0
    %305 = vmatprep.subr.mxu0 0.0
    %306 = vmatpush2.msra.mxu0 0.0
    %307 = vmatprep.subr.mxu0 0.0
    %308 = vmatpush2.msra.mxu0 0.0
    %309 = vmatprep.subr.mxu0 0.0
    %310 = vmatpush2.msra.mxu0 0.0
    %311 = vmatprep.subr.mxu0 0.0
    %312 = vmatpush2.msra.mxu0 0.0
    %313 = vmatprep.subr.mxu0 0.0
    %314 = vmatpush2.msra.mxu0 0.0
    %315 = vmatprep.subr.mxu0 0.0
    %316 = vmatpush2.msra.mxu0 0.0
    %317 = vmatprep.subr.mxu0 0.0
    %318 = vmatpush2.msra.mxu0 0.0
    %319 = vmatprep.subr.mxu0 0.0
    %320 = vmatpush2.msra.mxu0 0.0
    %321 = vmatprep.subr.mxu0 0.0
    %322 = vmatpush2.msra.mxu0 0.0
    %323 = vmatprep.mubr.f32.mxu0 0.0
    %324 = vmatmul.mubr.f32.gmra.mxu0 %v235
    %v325 = vpop.f32.mrf.mxu0
    %v326 = vadd.f32 %v257, %v325
    %v327 = vpop.f32.mrf.mxu0
    %328 = vdwg.mxu0
    %329 = vst [vmem:[%s7] sm:$0xff] %v326
    // Predicated region
    $region38: #{dqn_forward.1} parent=1 // pred_check
      _
    $region39: #{dqn_forward.1} parent=1 // pred_check_branch
      %331 = sbr.rel (0) target = $region41
    $region40: #{dqn_forward.1} parent=1 // pred_region
      _
    $region41: #{dqn_forward.1} parent=1 // pred_fallthru
      _
    // Predicated region
    $region42: #{dqn_forward.1} parent=1 // pred_check
      _
    $region43: #{dqn_forward.1} parent=1 // pred_check_branch
      %333 = sbr.rel (0) target = $region45
    $region44: #{dqn_forward.1} parent=1 // pred_region
      _
    $region45: #{dqn_forward.1} parent=1 // pred_fallthru
      _
    %334 = vsyncpa [#allocation3], 1
    %335 = vsyncpa [#allocation5], 1

</llo_original>
